<compile_context>
chip_gen: v5e
topology: v5e:2x2
jax: 0.10.0
libtpu: 0.0.40
codegen_flags: <defaults>
</compile_context>

<pallas_src>
import jax
import jax.numpy as jnp
from jax.experimental import pallas as pl
from jax.experimental.pallas import tpu as pltpu

EPS = 1e-5


def _round_up(x, m):
    return (x + m - 1) // m * m


# --------------------------------------------------------------------------
# Pass 1: one K=9*Cin MXU matmul per row tile + per-tile BN partial stats.
# --------------------------------------------------------------------------
def conv_stats_kernel(p_ref, w_ref, y_ref, sum_ref, ssq_ref):
    # p_ref:   (TM, 9*Cin)      im2col patch rows (compute dtype)
    # w_ref:   (9*Cin, Cout_p)  folded conv weights (compute dtype)
    # y_ref:   (TM, Cout_p)     raw conv output (intermediate dtype)
    # sum_ref: (1, 1, Cout_p)   per-tile partial sum   (f32, from f32 acc)
    # ssq_ref: (1, 1, Cout_p)   per-tile partial sum^2 (f32, from f32 acc)
    acc = jnp.dot(p_ref[...], w_ref[...], preferred_element_type=jnp.float32)
    y_ref[...] = acc.astype(y_ref.dtype)
    sum_ref[0] = jnp.sum(acc, axis=0, keepdims=True)
    ssq_ref[0] = jnp.sum(acc * acc, axis=0, keepdims=True)


# --------------------------------------------------------------------------
# Pass 2: row-tiled normalize + affine + ReLU.
# --------------------------------------------------------------------------
def bn_relu_kernel(y_ref, scale_ref, shift_ref, o_ref):
    y = y_ref[...].astype(jnp.float32)
    o_ref[...] = jnp.maximum(y * scale_ref[...] + shift_ref[...],
                             0.0).astype(o_ref.dtype)


def unit_forward_nhwc(x_nhwc, w_oihw, bias, gamma, beta,
                      *, compute_dtype=jnp.float32, row_tile=512):
    """Unit forward on NHWC input -> NHWC output (same dtype as x)."""
    del bias  # exact no-op: conv bias cancels under train-mode BatchNorm.
    n, h, w, cin = x_nhwc.shape
    cout = w_oihw.shape[0]
    # Lane-dense padding only when Cout is already >= 128; for small Cout the
    # masked stores cost far fewer HBM bytes than padding to 128 lanes.
    cout_p = cout if cout < 128 else _round_up(cout, 128)
    k = 9 * cin
    m = n * h * w
    tm = int(row_tile)
    mp = _round_up(m, tm)
    n_tiles = mp // tm

    # --- glue: fused im2col.  Column order of the patch rows is (dy, dx, cin),
    # matching the weight reshape below.  Padded tail rows are zero, so they
    # contribute nothing to the BN partial statistics.
    xp = jnp.pad(x_nhwc, ((0, 0), (1, 1), (1, 1), (0, 0)))
    patches = jnp.concatenate(
        [xp[:, dy:dy + h, dx:dx + w, :] for dy in range(3) for dx in range(3)],
        axis=-1).reshape(m, k)
    if mp != m:
        patches = jnp.pad(patches, ((0, mp - m), (0, 0)))
    patches = patches.astype(compute_dtype)

    # (Cout, Cin, 3, 3) -> (3, 3, Cin, Cout) -> (9*Cin, Cout_p)
    w_mat = jnp.transpose(w_oihw, (2, 3, 1, 0)).reshape(k, cout)
    if cout_p != cout:
        w_mat = jnp.pad(w_mat, ((0, 0), (0, cout_p - cout)))
    w_mat = w_mat.astype(compute_dtype)

    inter_dtype = compute_dtype  # bf16 intermediate halves HBM traffic
    conv_out, psum, pssq = pl.pallas_call(
        conv_stats_kernel,
        out_shape=(
            jax.ShapeDtypeStruct((mp, cout_p), inter_dtype),
            jax.ShapeDtypeStruct((n_tiles, 1, cout_p), jnp.float32),
            jax.ShapeDtypeStruct((n_tiles, 1, cout_p), jnp.float32),
        ),
        grid=(n_tiles,),
        in_specs=[
            pl.BlockSpec((tm, k), lambda i: (i, 0)),
            pl.BlockSpec((k, cout_p), lambda i: (0, 0)),
        ],
        out_specs=(
            pl.BlockSpec((tm, cout_p), lambda i: (i, 0)),
            pl.BlockSpec((1, 1, cout_p), lambda i: (i, 0, 0)),
            pl.BlockSpec((1, 1, cout_p), lambda i: (i, 0, 0)),
        ),
        compiler_params=pltpu.CompilerParams(
            dimension_semantics=("parallel",),
            vmem_limit_bytes=32 * 1024 * 1024),
    )(patches, w_mat)

    # --- glue: combine per-tile partial stats, fold BN affine into scale/shift
    cnt = jnp.float32(m)
    mean = jnp.sum(psum[:, 0, :], axis=0) / cnt
    var = jnp.maximum(jnp.sum(pssq[:, 0, :], axis=0) / cnt - mean * mean, 0.0)
    gamma_p = gamma.astype(jnp.float32)
    beta_p = beta.astype(jnp.float32)
    if cout_p != cout:
        gamma_p = jnp.pad(gamma_p, (0, cout_p - cout))
        beta_p = jnp.pad(beta_p, (0, cout_p - cout))
    scale = (gamma_p * jax.lax.rsqrt(var + EPS)).reshape(1, cout_p)
    shift = (beta_p - mean * scale[0]).reshape(1, cout_p)

    # --- pass 2: normalize + affine + ReLU, same fixed row tile, parallel grid
    out_dtype = x_nhwc.dtype
    out_flat = pl.pallas_call(
        bn_relu_kernel,
        out_shape=jax.ShapeDtypeStruct((mp, cout_p), out_dtype),
        grid=(n_tiles,),
        in_specs=[
            pl.BlockSpec((tm, cout_p), lambda i: (i, 0)),
            pl.BlockSpec((1, cout_p), lambda i: (0, 0)),
            pl.BlockSpec((1, cout_p), lambda i: (0, 0)),
        ],
        out_specs=pl.BlockSpec((tm, cout_p), lambda i: (i, 0)),
        compiler_params=pltpu.CompilerParams(
            dimension_semantics=("parallel",),
            vmem_limit_bytes=32 * 1024 * 1024),
    )(conv_out, scale, shift)

    # Drop padded tail rows / pad channels; reshape is layout-contiguous.
    return out_flat[:m, :cout].reshape(n, h, w, cout)


def unit_forward(x_nchw, w_oihw, bias, gamma, beta,
                 *, compute_dtype=jnp.float32, row_tile=512):
    """PyTorch-layout (NCHW) wrapper; prefer unit_forward_nhwc to skip transposes."""
    x_nhwc = jnp.transpose(x_nchw, (0, 2, 3, 1))
    out_nhwc = unit_forward_nhwc(x_nhwc, w_oihw, bias, gamma, beta,
                                 compute_dtype=compute_dtype, row_tile=row_tile)
    return jnp.transpose(out_nhwc, (0, 3, 1, 2))


def unit_reference(x_nchw, w_oihw, bias, gamma, beta):
    """Pure-JAX reference matching PyTorch Unit.forward (train-mode BN)."""
    out = jax.lax.conv_general_dilated(
        x_nchw, w_oihw, window_strides=(1, 1), padding=((1, 1), (1, 1)),
        dimension_numbers=("NCHW", "OIHW", "NCHW"))
    out = out + bias[None, :, None, None]
    mean = out.mean(axis=(0, 2, 3), keepdims=True)
    var = ((out - mean) ** 2).mean(axis=(0, 2, 3), keepdims=True)
    y = (out - mean) * jax.lax.rsqrt(var + EPS)
    y = y * gamma[None, :, None, None] + beta[None, :, None, None]
    return jnp.maximum(y, 0.0)


if __name__ == "__main__":
    # Small shapes consistent with the module: batch=2, Cin=4, Cout=8, 16x16.
    N, CIN, COUT, H, W = 2, 4, 8, 16, 16

    key = jax.random.PRNGKey(0)
    kx, kw, kb, kg, kbt = jax.random.split(key, 5)

    x = jax.random.normal(kx, (N, CIN, H, W), dtype=jnp.float32)
    conv_w = 0.1 * jax.random.normal(kw, (COUT, CIN, 3, 3), dtype=jnp.float32)
    conv_b = 0.1 * jax.random.normal(kb, (COUT,), dtype=jnp.float32)
    bn_gamma = 1.0 + 0.1 * jax.random.normal(kg, (COUT,), dtype=jnp.float32)
    bn_beta = 0.1 * jax.random.normal(kbt, (COUT,), dtype=jnp.float32)

    ref = jax.block_until_ready(
        unit_reference(x, conv_w, conv_b, bn_gamma, bn_beta))

    # f32 operands; row_tile=192 exercises the ragged-tail (padded rows) path.
    out = jax.block_until_ready(
        unit_forward(x, conv_w, conv_b, bn_gamma, bn_beta,
                     compute_dtype=jnp.float32, row_tile=192))
    assert out.shape == (N, COUT, H, W), out.shape
    assert jnp.allclose(out, ref, atol=1e-3, rtol=1e-3), (
        float(jnp.max(jnp.abs(out - ref))))

    # bf16 operands + bf16 intermediate; accumulation / BN stats stay f32.
    out_bf16 = jax.block_until_ready(
        unit_forward(x, conv_w, conv_b, bn_gamma, bn_beta,
                     compute_dtype=jnp.bfloat16, row_tile=128))
    assert out_bf16.shape == (N, COUT, H, W), out_bf16.shape
    assert jnp.allclose(out_bf16, ref, atol=5e-2, rtol=5e-2), (
        float(jnp.max(jnp.abs(out_bf16 - ref))))

    print("KERNEL_OK")
</pallas_src>

<mosaic_0001>
module attributes {stable_mosaic.version = 11 : i64} {
  func.func @conv_stats_kernel(%arg0: i32, %arg1: memref<192x36xf32, #tpu.memory_space<vmem>>, %arg2: memref<36x8xf32, #tpu.memory_space<vmem>>, %arg3: memref<192x8xf32, #tpu.memory_space<vmem>>, %arg4: memref<1x1x8xf32, #tpu.memory_space<vmem>>, %arg5: memref<1x1x8xf32, #tpu.memory_space<vmem>>) attributes {dimension_semantics = [#tpu.dimension_semantics<parallel>], iteration_bounds = array<i64: 3>, scalar_prefetch = 0 : i64, scratch_operands = 0 : i64, tpu.core_type = #tpu.core_type<tc>, window_params = [{transform_indices = @transform_0, window_bounds = array<i64: 192, 36>}, {pipeline_mode = #tpu.pipeline_mode<synchronous>, transform_indices = @transform_1, window_bounds = array<i64: 36, 8>}, {transform_indices = @transform_2, window_bounds = array<i64: 192, 8>}, {transform_indices = @transform_3, window_bounds = array<i64: 1, 1, 8>}, {transform_indices = @transform_4, window_bounds = array<i64: 1, 1, 8>}]} {
    %c0 = arith.constant 0 : index
    %c0_0 = arith.constant 0 : index
    %0 = vector.load %arg1[%c0, %c0_0] : memref<192x36xf32, #tpu.memory_space<vmem>>, vector<192x36xf32>
    %c0_1 = arith.constant 0 : index
    %c0_2 = arith.constant 0 : index
    %1 = vector.load %arg2[%c0_1, %c0_2] : memref<36x8xf32, #tpu.memory_space<vmem>>, vector<36x8xf32>
    %cst = arith.constant dense<0.000000e+00> : vector<192x8xf32>
    %2 = tpu.matmul %0, %1, %cst {dimension_numbers = #tpu.dot_dimension_numbers<[1], [0], [0], [1], [0, 0, 1, 1], [], []>} : vector<192x36xf32>, vector<36x8xf32>, vector<192x8xf32> -> vector<192x8xf32>
    %c0_3 = arith.constant 0 : index
    %c0_4 = arith.constant 0 : index
    %3 = vector.load %arg3[%c0_3, %c0_4] : memref<192x8xf32, #tpu.memory_space<vmem>>, vector<192x8xf32>
    tpu.vector_store %arg3[%c0_3, %c0_4], %2 {strides = array<i32>} : memref<192x8xf32, #tpu.memory_space<vmem>>, vector<192x8xf32>,
    %cst_5 = arith.constant dense<0.000000e+00> : vector<8xf32>
    %4 = vector.multi_reduction <add>, %2, %cst_5 [0] : vector<192x8xf32> to vector<8xf32>
    %5 = vector.shape_cast %4 : vector<8xf32> to vector<1x8xf32>
    %c0_6 = arith.constant 0 : index
    %c0_7 = arith.constant 0 : index
    %c0_8 = arith.constant 0 : index
    %6 = vector.load %arg4[%c0_6, %c0_7, %c0_8] : memref<1x1x8xf32, #tpu.memory_space<vmem>>, vector<1x1x8xf32>
    %7 = vector.shape_cast %6 : vector<1x1x8xf32> to vector<1x8xf32>
    %8 = vector.shape_cast %5 : vector<1x8xf32> to vector<1x1x8xf32>
    tpu.vector_store %arg4[%c0_6, %c0_7, %c0_8], %8 {strides = array<i32>} : memref<1x1x8xf32, #tpu.memory_space<vmem>>, vector<1x1x8xf32>,
    %9 = arith.mulf %2, %2 : vector<192x8xf32>
    %cst_9 = arith.constant dense<0.000000e+00> : vector<8xf32>
    %10 = vector.multi_reduction <add>, %9, %cst_9 [0] : vector<192x8xf32> to vector<8xf32>
    %11 = vector.shape_cast %10 : vector<8xf32> to vector<1x8xf32>
    %c0_10 = arith.constant 0 : index
    %c0_11 = arith.constant 0 : index
    %c0_12 = arith.constant 0 : index
    %12 = vector.load %arg5[%c0_10, %c0_11, %c0_12] : memref<1x1x8xf32, #tpu.memory_space<vmem>>, vector<1x1x8xf32>
    %13 = vector.shape_cast %12 : vector<1x1x8xf32> to vector<1x8xf32>
    %14 = vector.shape_cast %11 : vector<1x8xf32> to vector<1x1x8xf32>
    tpu.vector_store %arg5[%c0_10, %c0_11, %c0_12], %14 {strides = array<i32>} : memref<1x1x8xf32, #tpu.memory_space<vmem>>, vector<1x1x8xf32>,
    return
  }
  func.func @transform_0(%arg0: i32) -> (i32, i32) {
    %c0_i32 = arith.constant 0 : i32
    %c0_i32_0 = arith.constant 0 : i32
    return %arg0, %c0_i32 : i32, i32
  }
  func.func @transform_1(%arg0: i32) -> (i32, i32) {
    %c0_i32 = arith.constant 0 : i32
    %c0_i32_0 = arith.constant 0 : i32
    %c0_i32_1 = arith.constant 0 : i32
    return %c0_i32, %c0_i32_0 : i32, i32
  }
  func.func @transform_2(%arg0: i32) -> (i32, i32) {
    %c0_i32 = arith.constant 0 : i32
    %c0_i32_0 = arith.constant 0 : i32
    return %arg0, %c0_i32 : i32, i32
  }
  func.func @transform_3(%arg0: i32) -> (i32, i32, i32) {
    %c0_i32 = arith.constant 0 : i32
    %c0_i32_0 = arith.constant 0 : i32
    %c0_i32_1 = arith.constant 0 : i32
    return %arg0, %c0_i32, %c0_i32_0 : i32, i32, i32
  }
  func.func @transform_4(%arg0: i32) -> (i32, i32, i32) {
    %c0_i32 = arith.constant 0 : i32
    %c0_i32_0 = arith.constant 0 : i32
    %c0_i32_1 = arith.constant 0 : i32
    return %arg0, %c0_i32, %c0_i32_0 : i32, i32, i32
  }
}

</mosaic_0001>

<llo_original>
// kernel: tpu_custom_call.1
$region0: #{tpu_custom_call.1}
  #allocation0 [shape = 'u32[]', space=smem, size = 0x4, offset = 0x4, fixed_abs, tag = 'smem constant byte address 0x4 - core index']
  #allocation1 [shape = 'u32[72,128]{1,0:T(1,128)}', space=vmem, size = 0x9000, scoped, tag = 'internal scratch']
  %s0 = inlined_call_operand.vmem [shape: f32[576,36], index: 0, kind: input, shape index: {}]
  %s1 = inlined_call_operand.vmem [shape: f32[36,8], index: 1, kind: input, shape index: {}]
  %s2 = inlined_call_operand.vmem [shape: f32[576,8], index: 2, kind: output, shape index: {0}]
  %s3 = inlined_call_operand.hbm [shape: f32[3,1,8], index: 3, kind: output, shape index: {1}]
  %s4 = inlined_call_operand.hbm [shape: f32[3,1,8], index: 4, kind: output, shape index: {2}]
  %5 = xla_tuple %s2, %s3, %s4
  %s6 = sld [smem:[#allocation0]]
  $region57: #{tpu_custom_call.1} parent=0
    _
  %s8 = ssub.s32 1, %s6
  %s9 = scalar_select 0, %s8, %s6
  $region1: #{tpu_custom_call.1} parent=0
    #allocation2 [shape = 'u8[1024]{0}', space=vmem, size = 0x400, scoped, tag = 'output window, operand 1']
    #allocation3 [shape = 's32[2]{0}', space=sflag, size = 0x8, scoped, tag = 'scoped memory for tpu_custom_call.1']
    #allocation4 [shape = 'u8[1024]{0}', space=vmem, size = 0x400, scoped, tag = 'output window, operand 2']
    #allocation5 [shape = 's32[2]{0}', space=sflag, size = 0x8, scoped, tag = 'scoped memory for tpu_custom_call.1']
    %10 = vsyncpa [#allocation3], 0
    %s11 = scalar_lea.sflag [#allocation3], 1
    %12 = vsyncpa %s11, 0
    %13 = vsyncpa [#allocation5], 0
    %s14 = scalar_lea.sflag [#allocation5], 1
    %15 = vsyncpa %s14, 0
    loop: start=0, step=1, limit=5
    $region2: #{tpu_custom_call.1} parent=1 // loop_pre_header
      _
    $region3: #{tpu_custom_call.1} parent=1 // loop_header
      %s17 = sphi 0, %s21
      %p18 = scmp.ge.s32.totalorder %s17, 5
      %s27 = sphi 0, %s29
      %s30 = sphi 0, %s27
      %s31 = sphi 0, %s30
      %s47 = sphi 0, %s31
      %s51 = sphi 0, %s51
      %s53 = sphi 0, %s51
      %s54 = sphi 0, %s53
      %s68 = sphi 0, %s54
      %s74 = sphi 0, %s76
      %s77 = sphi 0, %s74
      %s78 = sphi 0, %s77
      %s94 = sphi 0, %s78
      %s100 = sphi 0, %s102
      %s103 = sphi 0, %s100
      %s104 = sphi 0, %s103
      %s120 = sphi 0, %s104
      %s126 = sphi 0, %s128
      %s129 = sphi 0, %s126
      %s130 = sphi 0, %s129
      %s146 = sphi 0, %s130
    $region4: #{tpu_custom_call.1} parent=1 // loop_header_branch
      %20 = sbr.rel (%p18) target = $region8
    $region5: #{tpu_custom_call.1} parent=1 // loop_body
      %s22 = ssub.s32 %s17, 1
      %s23 = ssub.s32 %s17, 2
      %s24 = sadd.s32 %s17, 1
      %s25 = ssub.s32 %s17, %s24
      %p26 = scmp.eq.s32.totalorder %s25, 0
      %s28 = sadd.s32 %s27, 1
      %s29 = scalar_select %p26, %s27, %s28
      %p32 = pneg %p26
      %p33 = scmp.eq.s32.totalorder %s17, 2
      %p34 = por %p32, %p33
      %p35 = scmp.ne.s32.totalorder %s27, %s30
      %p36 = scmp.eq.s32.totalorder %s17, 0
      %p37 = por %p35, %p36
      %p38 = scmp.ne.s32.totalorder %s27, %s30
      %p39 = scmp.eq.s32.totalorder %s22, 2
      %p40 = por %p38, %p39
      %p41 = scmp.ne.s32.totalorder %s30, %s31
      %p42 = scmp.eq.s32.totalorder %s22, 0
      %p43 = por %p41, %p42
      %p44 = scmp.ne.s32.totalorder %s30, %s31
      %p45 = scmp.eq.s32.totalorder %s23, 2
      %p46 = por %p44, %p45
      %p48 = scmp.ne.s32.totalorder %s31, %s47
      %p49 = scmp.eq.s32.totalorder %s23, 0
      %p50 = por %p48, %p49
      %s52 = sadd.s32 %s51, 1
      %p55 = scmp.eq.s32.totalorder %s17, 2
      %p56 = scmp.ne.s32.totalorder %s51, %s53
      %p57 = scmp.eq.s32.totalorder %s17, 0
      %p58 = por %p56, %p57
      %p59 = scmp.ne.s32.totalorder %s51, %s53
      %p60 = scmp.eq.s32.totalorder %s22, 2
      %p61 = por %p59, %p60
      %p62 = scmp.ne.s32.totalorder %s53, %s54
      %p63 = scmp.eq.s32.totalorder %s22, 0
      %p64 = por %p62, %p63
      %p65 = scmp.ne.s32.totalorder %s53, %s54
      %p66 = scmp.eq.s32.totalorder %s23, 2
      %p67 = por %p65, %p66
      %p69 = scmp.ne.s32.totalorder %s54, %s68
      %p70 = scmp.eq.s32.totalorder %s23, 0
      %p71 = por %p69, %p70
      %s72 = ssub.s32 %s17, %s24
      %p73 = scmp.eq.s32.totalorder %s72, 0
      %s75 = sadd.s32 %s74, 1
      %s76 = scalar_select %p73, %s74, %s75
      %p79 = pneg %p73
      %p80 = scmp.eq.s32.totalorder %s17, 2
      %p81 = por %p79, %p80
      %p82 = scmp.ne.s32.totalorder %s74, %s77
      %p83 = scmp.eq.s32.totalorder %s17, 0
      %p84 = por %p82, %p83
      %p85 = scmp.ne.s32.totalorder %s74, %s77
      %p86 = scmp.eq.s32.totalorder %s22, 2
      %p87 = por %p85, %p86
      %p88 = scmp.ne.s32.totalorder %s77, %s78
      %p89 = scmp.eq.s32.totalorder %s22, 0
      %p90 = por %p88, %p89
      %p91 = scmp.ne.s32.totalorder %s77, %s78
      %p92 = scmp.eq.s32.totalorder %s23, 2
      %p93 = por %p91, %p92
      %p95 = scmp.ne.s32.totalorder %s78, %s94
      %p96 = scmp.eq.s32.totalorder %s23, 0
      %p97 = por %p95, %p96
      %s98 = ssub.s32 %s17, %s24
      %p99 = scmp.eq.s32.totalorder %s98, 0
      %s101 = sadd.s32 %s100, 1
      %s102 = scalar_select %p99, %s100, %s101
      %p105 = pneg %p99
      %p106 = scmp.eq.s32.totalorder %s17, 2
      %p107 = por %p105, %p106
      %p108 = scmp.ne.s32.totalorder %s100, %s103
      %p109 = scmp.eq.s32.totalorder %s17, 0
      %p110 = por %p108, %p109
      %p111 = scmp.ne.s32.totalorder %s100, %s103
      %p112 = scmp.eq.s32.totalorder %s22, 2
      %p113 = por %p111, %p112
      %p114 = scmp.ne.s32.totalorder %s103, %s104
      %p115 = scmp.eq.s32.totalorder %s22, 0
      %p116 = por %p114, %p115
      %p117 = scmp.ne.s32.totalorder %s103, %s104
      %p118 = scmp.eq.s32.totalorder %s23, 2
      %p119 = por %p117, %p118
      %p121 = scmp.ne.s32.totalorder %s104, %s120
      %p122 = scmp.eq.s32.totalorder %s23, 0
      %p123 = por %p121, %p122
      %s124 = ssub.s32 %s17, %s24
      %p125 = scmp.eq.s32.totalorder %s124, 0
      %s127 = sadd.s32 %s126, 1
      %s128 = scalar_select %p125, %s126, %s127
      %p131 = pneg %p125
      %p132 = scmp.eq.s32.totalorder %s17, 2
      %p133 = por %p131, %p132
      %p134 = scmp.ne.s32.totalorder %s126, %s129
      %p135 = scmp.eq.s32.totalorder %s17, 0
      %p136 = por %p134, %p135
      %p137 = scmp.ne.s32.totalorder %s126, %s129
      %p138 = scmp.eq.s32.totalorder %s22, 2
      %p139 = por %p137, %p138
      %p140 = scmp.ne.s32.totalorder %s129, %s130
      %p141 = scmp.eq.s32.totalorder %s22, 0
      %p142 = por %p140, %p141
      %p143 = scmp.ne.s32.totalorder %s129, %s130
      %p144 = scmp.eq.s32.totalorder %s23, 2
      %p145 = por %p143, %p144
      %p147 = scmp.ne.s32.totalorder %s130, %s146
      %p148 = scmp.eq.s32.totalorder %s23, 0
      %p149 = por %p147, %p148
      %p150 = scmp.le.s32.totalorder 1, %s17
      %p151 = scmp.lt.s32.totalorder %s17, 4
      %p152 = pnand %p150, %p151
      %p153 = pneg %p152
      // Predicated region
      $region9: #{tpu_custom_call.1} parent=5 // pred_check
        _
      $region10: #{tpu_custom_call.1} parent=5 // pred_check_branch
        %155 = sbr.rel (%p152) target = $region12
      $region11: #{tpu_custom_call.1} parent=5 // pred_region
        %s156 = ssub.s32 %s17, 1
        // Predicated region
        $region13: #{tpu_custom_call.1} parent=11 // pred_check
          %p157 = pneg %p64
        $region14: #{tpu_custom_call.1} parent=11 // pred_check_branch
          %159 = sbr.rel (%p157) target = $region16
        $region15: #{tpu_custom_call.1} parent=11 // pred_region
          _
        $region16: #{tpu_custom_call.1} parent=11 // pred_fallthru
          _
      $region12: #{tpu_custom_call.1} parent=5 // pred_fallthru
        _
      %p160 = scmp.lt.s32.totalorder %s17, 3
      // Predicated region
      $region17: #{tpu_custom_call.1} parent=5 // pred_check
        %p161 = pneg %p160
      $region18: #{tpu_custom_call.1} parent=5 // pred_check_branch
        %163 = sbr.rel (%p161) target = $region20
      $region19: #{tpu_custom_call.1} parent=5 // pred_region
        // Predicated region
        $region21: #{tpu_custom_call.1} parent=19 // pred_check
          %p164 = pneg %p37
        $region22: #{tpu_custom_call.1} parent=19 // pred_check_branch
          %166 = sbr.rel (%p164) target = $region24
        $region23: #{tpu_custom_call.1} parent=19 // pred_region
          %s167 = smul.u32 24, %s17
          %p168 = scmp.lt.s32.totalorder %s167, 71
          %s169 = scalar_select %p168, %s167, 71
          %s170 = smul.addr %s169, 8
          %s171 = scalar_lea.vmem %s0, %s170
          %s172 = smul.u32 24, %s17
        $region24: #{tpu_custom_call.1} parent=19 // pred_fallthru
          _
      $region20: #{tpu_custom_call.1} parent=5 // pred_fallthru
        _
      %p173 = scmp.le.s32.totalorder 1, %s17
      %p174 = scmp.lt.s32.totalorder %s17, 4
      %p175 = pnand %p173, %p174
      %p176 = pneg %p175
      // Predicated region
      $region25: #{tpu_custom_call.1} parent=5 // pred_check
        _
      $region26: #{tpu_custom_call.1} parent=5 // pred_check_branch
        %178 = sbr.rel (%p175) target = $region28
      $region27: #{tpu_custom_call.1} parent=5 // pred_region
        %s179 = ssub.s32 %s17, 1
        %s180 = smul.u32 24, %s22
        %p181 = scmp.lt.s32.totalorder %s180, 71
        %s182 = scalar_select %p181, %s180, 71
        %s183 = smul.addr %s182, 8
        %s184 = scalar_lea.vmem %s0, %s183
        %p185 = pneg %p43
        %p186 = pneg %p40
        %p187 = pneg %p64
        %p188 = pneg %p61
        %p189 = pneg %p90
        %p190 = pneg %p87
        %s191 = smul.u32 24, %s22
        %p192 = scmp.lt.s32.totalorder %s191, 71
        %s193 = scalar_select %p192, %s191, 71
        %s194 = smul.addr %s193, 8
        %s195 = scalar_lea.vmem %s2, %s194
        %p196 = pneg %p116
        %p197 = pneg %p113
        %s198 = sand.u32 %s103, 1
        %s199 = scalar_lea.sflag [#allocation3], %s198
        %s200 = sand.u32 %s103, 1
        %s201 = scalar_lea.vmem [#allocation2], %s200
        %p202 = pneg %p142
        %p203 = pneg %p139
        %s204 = sand.u32 %s129, 1
        %s205 = scalar_lea.sflag [#allocation5], %s204
        %s206 = sand.u32 %s129, 1
        %s207 = scalar_lea.vmem [#allocation4], %s206
        %s208 = smul.u32 24, %s22
        %p209 = scmp.lt.s32.totalorder %s208, 71
        %s210 = scalar_select %p209, %s208, 71
        %s211 = smul.addr %s210, 8
        %s212 = scalar_lea.vmem %s0, %s211
        %s213 = smul.u32 24, %s22
        %s214 = smul.u32 24, %s22
        %p215 = scmp.lt.s32.totalorder %s214, 71
        %s216 = scalar_select %p215, %s214, 71
        %s217 = smul.addr %s216, 8
        %s218 = scalar_lea.vmem %s2, %s217
        %s219 = smul.u32 24, %s22
        %v220 = vld [vmem:[%s212] sm:$0xff]
        %v221 = vld [vmem:[%s212 + $0x8] sm:$0xff]
        %v222 = vld [vmem:[%s212 + $0x10] sm:$0xff]
        %v223 = vld [vmem:[%s212 + $0x18] sm:$0xff]
        %v224 = vld [vmem:[%s212 + $0x20] sm:$0xff]
        %v225 = vld [vmem:[%s212 + $0x28] sm:$0xff]
        %v226 = vld [vmem:[%s212 + $0x30] sm:$0xff]
        %v227 = vld [vmem:[%s212 + $0x38] sm:$0xff]
        %v228 = vld [vmem:[%s212 + $0x40] sm:$0xff]
        %v229 = vld [vmem:[%s212 + $0x48] sm:$0xff]
        %v230 = vld [vmem:[%s212 + $0x50] sm:$0xff]
        %v231 = vld [vmem:[%s212 + $0x58] sm:$0xff]
        %v232 = vld [vmem:[%s212 + $0x60] sm:$0xff]
        %v233 = vld [vmem:[%s212 + $0x68] sm:$0xff]
        %v234 = vld [vmem:[%s212 + $0x70] sm:$0xff]
        %v235 = vld [vmem:[%s212 + $0x78] sm:$0xff]
        %v236 = vld [vmem:[%s212 + $0x80] sm:$0xff]
        %v237 = vld [vmem:[%s212 + $0x88] sm:$0xff]
        %v238 = vld [vmem:[%s212 + $0x90] sm:$0xff]
        %v239 = vld [vmem:[%s212 + $0x98] sm:$0xff]
        %v240 = vld [vmem:[%s212 + $0xa0] sm:$0xff]
        %v241 = vld [vmem:[%s212 + $0xa8] sm:$0xff]
        %v242 = vld [vmem:[%s212 + $0xb0] sm:$0xff]
        %v243 = vld [vmem:[%s212 + $0xb8] sm:$0xff]
        %v244 = vld [vmem:[%s1] sm:$0xff]
        %v245 = vld [vmem:[%s1 + $0x8] sm:$0xff]
        %v246 = vld [vmem:[%s1 + $0x10] sm:$0xff]
        %v247 = vld [vmem:[%s1 + $0x18] sm:$0xff]
        %v248 = vld [vmem:[%s1 + $0x20] sm:$0xf]
        %vm249 = vcmask 293888
        %v251 = vsel %vm249, %v220, 0
        %v254 = vsel %vm249, %v221, 0
        %v257 = vsel %vm249, %v222, 0
        %v260 = vsel %vm249, %v223, 0
        %v263 = vsel %vm249, %v224, 0
        %v266 = vsel %vm249, %v225, 0
        %v269 = vsel %vm249, %v226, 0
        %v272 = vsel %vm249, %v227, 0
        %v275 = vsel %vm249, %v228, 0
        %v278 = vsel %vm249, %v229, 0
        %v281 = vsel %vm249, %v230, 0
        %v284 = vsel %vm249, %v231, 0
        %v287 = vsel %vm249, %v232, 0
        %v290 = vsel %vm249, %v233, 0
        %v293 = vsel %vm249, %v234, 0
        %v296 = vsel %vm249, %v235, 0
        %v299 = vsel %vm249, %v236, 0
        %v302 = vsel %vm249, %v237, 0
        %v305 = vsel %vm249, %v238, 0
        %v308 = vsel %vm249, %v239, 0
        %v311 = vsel %vm249, %v240, 0
        %v314 = vsel %vm249, %v241, 0
        %v317 = vsel %vm249, %v242, 0
        %v320 = vsel %vm249, %v243, 0
        %vm322 = vcmask 1043456
        %v324 = vsel %vm322, %v248, 0
        %326 = vmatpush.msra.mxu0 0.0
        %327 = vmatpush.msra.mxu0 0.0
        %328 = vmatpush.msra.mxu0 0.0
        %329 = vmatpush.msra.mxu0 0.0
        %330 = vmatpush.msra.mxu0 0.0
        %331 = vmatpush.msra.mxu0 0.0
        %332 = vmatpush.msra.mxu0 0.0
        %333 = vmatpush.msra.mxu0 0.0
        %334 = vmatpush.msra.mxu0 0.0
        %335 = vmatpush.msra.mxu0 0.0
        %336 = vmatpush.msra.mxu0 0.0
        %337 = vmatpush.msra.mxu0 %v324
        %338 = vmatpush.msra.mxu0 %v247
        %339 = vmatpush.msra.mxu0 %v246
        %340 = vmatpush.msra.mxu0 %v245
        %341 = vmatpush.msra.mxu0 %v244
        %342 = vmatmul.f32.gmra.mxu0 %v251
        %v343 = vpop.f32.mrf.mxu0
        %v344 = vadd.f32 0.0, %v343
        %345 = vmatmul.f32.gmra.mxu0 %v254
        %v346 = vpop.f32.mrf.mxu0
        %v347 = vadd.f32 0.0, %v346
        %348 = vmatmul.f32.gmra.mxu0 %v257
        %v349 = vpop.f32.mrf.mxu0
        %v350 = vadd.f32 0.0, %v349
        %351 = vmatmul.f32.gmra.mxu0 %v260
        %v352 = vpop.f32.mrf.mxu0
        %v353 = vadd.f32 0.0, %v352
        %354 = vmatmul.f32.gmra.mxu0 %v263
        %v355 = vpop.f32.mrf.mxu0
        %v356 = vadd.f32 0.0, %v355
        %357 = vmatmul.f32.gmra.mxu0 %v266
        %v358 = vpop.f32.mrf.mxu0
        %v359 = vadd.f32 0.0, %v358
        %360 = vmatmul.f32.gmra.mxu0 %v269
        %v361 = vpop.f32.mrf.mxu0
        %v362 = vadd.f32 0.0, %v361
        %363 = vmatmul.f32.gmra.mxu0 %v272
        %v364 = vpop.f32.mrf.mxu0
        %v365 = vadd.f32 0.0, %v364
        %366 = vmatmul.f32.gmra.mxu0 %v275
        %v367 = vpop.f32.mrf.mxu0
        %v368 = vadd.f32 0.0, %v367
        %369 = vmatmul.f32.gmra.mxu0 %v278
        %v370 = vpop.f32.mrf.mxu0
        %v371 = vadd.f32 0.0, %v370
        %372 = vmatmul.f32.gmra.mxu0 %v281
        %v373 = vpop.f32.mrf.mxu0
        %v374 = vadd.f32 0.0, %v373
        %375 = vmatmul.f32.gmra.mxu0 %v284
        %v376 = vpop.f32.mrf.mxu0
        %v377 = vadd.f32 0.0, %v376
        %378 = vmatmul.f32.gmra.mxu0 %v287
        %v379 = vpop.f32.mrf.mxu0
        %v380 = vadd.f32 0.0, %v379
        %381 = vmatmul.f32.gmra.mxu0 %v290
        %v382 = vpop.f32.mrf.mxu0
        %v383 = vadd.f32 0.0, %v382
        %384 = vmatmul.f32.gmra.mxu0 %v293
        %v385 = vpop.f32.mrf.mxu0
        %v386 = vadd.f32 0.0, %v385
        %387 = vmatmul.f32.gmra.mxu0 %v296
        %v388 = vpop.f32.mrf.mxu0
        %v389 = vadd.f32 0.0, %v388
        %390 = vmatmul.f32.gmra.mxu0 %v299
        %v391 = vpop.f32.mrf.mxu0
        %v392 = vadd.f32 0.0, %v391
        %393 = vmatmul.f32.gmra.mxu0 %v302
        %v394 = vpop.f32.mrf.mxu0
        %v395 = vadd.f32 0.0, %v394
        %396 = vmatmul.f32.gmra.mxu0 %v305
        %v397 = vpop.f32.mrf.mxu0
        %v398 = vadd.f32 0.0, %v397
        %399 = vmatmul.f32.gmra.mxu0 %v308
        %v400 = vpop.f32.mrf.mxu0
        %v401 = vadd.f32 0.0, %v400
        %402 = vmatmul.f32.gmra.mxu0 %v311
        %v403 = vpop.f32.mrf.mxu0
        %v404 = vadd.f32 0.0, %v403
        %405 = vmatmul.f32.gmra.mxu0 %v314
        %v406 = vpop.f32.mrf.mxu0
        %v407 = vadd.f32 0.0, %v406
        %408 = vmatmul.f32.gmra.mxu0 %v317
        %v409 = vpop.f32.mrf.mxu0
        %v410 = vadd.f32 0.0, %v409
        %411 = vmatmul.f32.gmra.mxu0 %v320
        %v412 = vpop.f32.mrf.mxu0
        %v413 = vadd.f32 0.0, %v412
        %414 = vdwg.mxu0
        %vm415 = vcmask 64512
        %416 = vst.msk [vmem:[%s218] sm:$0xff] %vm415, %v344
        %417 = vst.msk [vmem:[%s218 + $0x8] sm:$0xff] %vm415, %v347
        %418 = vst.msk [vmem:[%s218 + $0x10] sm:$0xff] %vm415, %v350
        %419 = vst.msk [vmem:[%s218 + $0x18] sm:$0xff] %vm415, %v353
        %420 = vst.msk [vmem:[%s218 + $0x20] sm:$0xff] %vm415, %v356
        %421 = vst.msk [vmem:[%s218 + $0x28] sm:$0xff] %vm415, %v359
        %422 = vst.msk [vmem:[%s218 + $0x30] sm:$0xff] %vm415, %v362
        %423 = vst.msk [vmem:[%s218 + $0x38] sm:$0xff] %vm415, %v365
        %424 = vst.msk [vmem:[%s218 + $0x40] sm:$0xff] %vm415, %v368
        %425 = vst.msk [vmem:[%s218 + $0x48] sm:$0xff] %vm415, %v371
        %426 = vst.msk [vmem:[%s218 + $0x50] sm:$0xff] %vm415, %v374
        %427 = vst.msk [vmem:[%s218 + $0x58] sm:$0xff] %vm415, %v377
        %428 = vst.msk [vmem:[%s218 + $0x60] sm:$0xff] %vm415, %v380
        %429 = vst.msk [vmem:[%s218 + $0x68] sm:$0xff] %vm415, %v383
        %430 = vst.msk [vmem:[%s218 + $0x70] sm:$0xff] %vm415, %v386
        %431 = vst.msk [vmem:[%s218 + $0x78] sm:$0xff] %vm415, %v389
        %432 = vst.msk [vmem:[%s218 + $0x80] sm:$0xff] %vm415, %v392
        %433 = vst.msk [vmem:[%s218 + $0x88] sm:$0xff] %vm415, %v395
        %434 = vst.msk [vmem:[%s218 + $0x90] sm:$0xff] %vm415, %v398
        %435 = vst.msk [vmem:[%s218 + $0x98] sm:$0xff] %vm415, %v401
        %436 = vst.msk [vmem:[%s218 + $0xa0] sm:$0xff] %vm415, %v404
        %437 = vst.msk [vmem:[%s218 + $0xa8] sm:$0xff] %vm415, %v407
        %438 = vst.msk [vmem:[%s218 + $0xb0] sm:$0xff] %vm415, %v410
        %439 = vst.msk [vmem:[%s218 + $0xb8] sm:$0xff] %vm415, %v413
        %v440 = vsel %vm415, %v344, 0.0
        %v441 = vsel %vm415, %v347, 0.0
        %v442 = vadd.f32 %v440, %v441
        %v443 = vsel %vm415, %v350, 0.0
        %v444 = vadd.f32 %v442, %v443
        %v445 = vsel %vm415, %v353, 0.0
        %v446 = vadd.f32 %v444, %v445
        %v447 = vsel %vm415, %v356, 0.0
        %v448 = vadd.f32 %v446, %v447
        %v449 = vsel %vm415, %v359, 0.0
        %v450 = vadd.f32 %v448, %v449
        %v451 = vsel %vm415, %v362, 0.0
        %v452 = vadd.f32 %v450, %v451
        %v453 = vsel %vm415, %v365, 0.0
        %v454 = vadd.f32 %v452, %v453
        %v455 = vsel %vm415, %v368, 0.0
        %v456 = vadd.f32 %v454, %v455
        %v457 = vsel %vm415, %v371, 0.0
        %v458 = vadd.f32 %v456, %v457
        %v459 = vsel %vm415, %v374, 0.0
        %v460 = vadd.f32 %v458, %v459
        %v461 = vsel %vm415, %v377, 0.0
        %v462 = vadd.f32 %v460, %v461
        %v463 = vsel %vm415, %v380, 0.0
        %v464 = vadd.f32 %v462, %v463
        %v465 = vsel %vm415, %v383, 0.0
        %v466 = vadd.f32 %v464, %v465
        %v467 = vsel %vm415, %v386, 0.0
        %v468 = vadd.f32 %v466, %v467
        %v469 = vsel %vm415, %v389, 0.0
        %v470 = vadd.f32 %v468, %v469
        %v471 = vsel %vm415, %v392, 0.0
        %v472 = vadd.f32 %v470, %v471
        %v473 = vsel %vm415, %v395, 0.0
        %v474 = vadd.f32 %v472, %v473
        %v475 = vsel %vm415, %v398, 0.0
        %v476 = vadd.f32 %v474, %v475
        %v477 = vsel %vm415, %v401, 0.0
        %v478 = vadd.f32 %v476, %v477
        %v479 = vsel %vm415, %v404, 0.0
        %v480 = vadd.f32 %v478, %v479
        %v481 = vsel %vm415, %v407, 0.0
        %v482 = vadd.f32 %v480, %v481
        %v483 = vsel %vm415, %v410, 0.0
        %v484 = vadd.f32 %v482, %v483
        %v485 = vsel %vm415, %v413, 0.0
        %v486 = vadd.f32 %v484, %v485
        %v487 = vrot.slane %v486, 4
        %v488 = vadd.f32 %v486, %v487
        %v489 = vrot.slane %v488, 2
        %v490 = vadd.f32 %v488, %v489
        %v491 = vrot.slane %v490, 1
        %v492 = vadd.f32 %v490, %v491
        %vm493 = vcmask 57344
        %494 = vst.msk [vmem:[%s201] sm:$0x1] %vm493, %v492
        %v495 = vmul.f32 %v344, %v344
        %v496 = vmul.f32 %v347, %v347
        %v497 = vmul.f32 %v350, %v350
        %v498 = vmul.f32 %v353, %v353
        %v499 = vmul.f32 %v356, %v356
        %v500 = vmul.f32 %v359, %v359
        %v501 = vmul.f32 %v362, %v362
        %v502 = vmul.f32 %v365, %v365
        %v503 = vmul.f32 %v368, %v368
        %v504 = vmul.f32 %v371, %v371
        %v505 = vmul.f32 %v374, %v374
        %v506 = vmul.f32 %v377, %v377
        %v507 = vmul.f32 %v380, %v380
        %v508 = vmul.f32 %v383, %v383
        %v509 = vmul.f32 %v386, %v386
        %v510 = vmul.f32 %v389, %v389
        %v511 = vmul.f32 %v392, %v392
        %v512 = vmul.f32 %v395, %v395
        %v513 = vmul.f32 %v398, %v398
        %v514 = vmul.f32 %v401, %v401
        %v515 = vmul.f32 %v404, %v404
        %v516 = vmul.f32 %v407, %v407
        %v517 = vmul.f32 %v410, %v410
        %v518 = vmul.f32 %v413, %v413
        %v519 = vsel %vm415, %v495, 0.0
        %v520 = vsel %vm415, %v496, 0.0
        %v521 = vadd.f32 %v519, %v520
        %v522 = vsel %vm415, %v497, 0.0
        %v523 = vadd.f32 %v521, %v522
        %v524 = vsel %vm415, %v498, 0.0
        %v525 = vadd.f32 %v523, %v524
        %v526 = vsel %vm415, %v499, 0.0
        %v527 = vadd.f32 %v525, %v526
        %v528 = vsel %vm415, %v500, 0.0
        %v529 = vadd.f32 %v527, %v528
        %v530 = vsel %vm415, %v501, 0.0
        %v531 = vadd.f32 %v529, %v530
        %v532 = vsel %vm415, %v502, 0.0
        %v533 = vadd.f32 %v531, %v532
        %v534 = vsel %vm415, %v503, 0.0
        %v535 = vadd.f32 %v533, %v534
        %v536 = vsel %vm415, %v504, 0.0
        %v537 = vadd.f32 %v535, %v536
        %v538 = vsel %vm415, %v505, 0.0
        %v539 = vadd.f32 %v537, %v538
        %v540 = vsel %vm415, %v506, 0.0
        %v541 = vadd.f32 %v539, %v540
        %v542 = vsel %vm415, %v507, 0.0
        %v543 = vadd.f32 %v541, %v542
        %v544 = vsel %vm415, %v508, 0.0
        %v545 = vadd.f32 %v543, %v544
        %v546 = vsel %vm415, %v509, 0.0
        %v547 = vadd.f32 %v545, %v546
        %v548 = vsel %vm415, %v510, 0.0
        %v549 = vadd.f32 %v547, %v548
        %v550 = vsel %vm415, %v511, 0.0
        %v551 = vadd.f32 %v549, %v550
        %v552 = vsel %vm415, %v512, 0.0
        %v553 = vadd.f32 %v551, %v552
        %v554 = vsel %vm415, %v513, 0.0
        %v555 = vadd.f32 %v553, %v554
        %v556 = vsel %vm415, %v514, 0.0
        %v557 = vadd.f32 %v555, %v556
        %v558 = vsel %vm415, %v515, 0.0
        %v559 = vadd.f32 %v557, %v558
        %v560 = vsel %vm415, %v516, 0.0
        %v561 = vadd.f32 %v559, %v560
        %v562 = vsel %vm415, %v517, 0.0
        %v563 = vadd.f32 %v561, %v562
        %v564 = vsel %vm415, %v518, 0.0
        %v565 = vadd.f32 %v563, %v564
        %v566 = vrot.slane %v565, 4
        %v567 = vadd.f32 %v565, %v566
        %v568 = vrot.slane %v567, 2
        %v569 = vadd.f32 %v567, %v568
        %v570 = vrot.slane %v569, 1
        %v571 = vadd.f32 %v569, %v570
        %572 = vst.msk [vmem:[%s207] sm:$0x1] %vm493, %v571
        %s573 = smul.u32 24, %s22
        %p574 = scmp.lt.s32.totalorder %s573, 71
        %s575 = scalar_select %p574, %s573, 71
        %s576 = smul.addr %s575, 8
        %s577 = scalar_lea.vmem %s2, %s576
        %s578 = sand.u32 %s103, 1
        %s579 = scalar_lea.sflag [#allocation3], %s578
        %s580 = sand.u32 %s103, 1
        %s581 = scalar_lea.vmem [#allocation2], %s580
        %s582 = sand.u32 %s129, 1
        %s583 = scalar_lea.sflag [#allocation5], %s582
        %s584 = sand.u32 %s129, 1
        %s585 = scalar_lea.vmem [#allocation4], %s584
        // Predicated region
        $region29: #{tpu_custom_call.1} parent=27 // pred_check
          %p586 = pneg %p87
        $region30: #{tpu_custom_call.1} parent=27 // pred_check_branch
          %588 = sbr.rel (%p586) target = $region32
        $region31: #{tpu_custom_call.1} parent=27 // pred_region
          %s589 = smul.u32 24, %s22
        $region32: #{tpu_custom_call.1} parent=27 // pred_fallthru
          _
        // Predicated region
        $region33: #{tpu_custom_call.1} parent=27 // pred_check
          %p590 = pneg %p113
        $region34: #{tpu_custom_call.1} parent=27 // pred_check_branch
          %592 = sbr.rel (%p590) target = $region36
        $region35: #{tpu_custom_call.1} parent=27 // pred_region
          %594 = vsyncadd %s579, 0
          %s595 = scalar_lea.hbm %s3, %s22
          %s597 = sshll.u32 %s581, 4
          %s598 = int_to_ptr.vmem [resolvable:$true] %s597
          %s599 = sshll.u32 %s595, 4
          %s600 = int_to_ptr.hbm [resolvable:$true] %s599
          %602 = dma.vmem_to_hbm [thread:$0]  %s598, 16, %s600, %s579
        $region36: #{tpu_custom_call.1} parent=27 // pred_fallthru
          _
        // Predicated region
        $region37: #{tpu_custom_call.1} parent=27 // pred_check
          %p603 = pneg %p139
        $region38: #{tpu_custom_call.1} parent=27 // pred_check_branch
          %605 = sbr.rel (%p603) target = $region40
        $region39: #{tpu_custom_call.1} parent=27 // pred_region
          %607 = vsyncadd %s583, 0
          %s608 = scalar_lea.hbm %s4, %s22
          %s610 = sshll.u32 %s585, 4
          %s611 = int_to_ptr.vmem [resolvable:$true] %s610
          %s612 = sshll.u32 %s608, 4
          %s613 = int_to_ptr.hbm [resolvable:$true] %s612
          %615 = dma.vmem_to_hbm [thread:$0]  %s611, 16, %s613, %s583
        $region40: #{tpu_custom_call.1} parent=27 // pred_fallthru
          _
      $region28: #{tpu_custom_call.1} parent=5 // pred_fallthru
        _
      %p616 = scmp.le.s32.totalorder 2, %s17
      // Predicated region
      $region41: #{tpu_custom_call.1} parent=5 // pred_check
        %p617 = pneg %p616
      $region42: #{tpu_custom_call.1} parent=5 // pred_check_branch
        %619 = sbr.rel (%p617) target = $region44
      $region43: #{tpu_custom_call.1} parent=5 // pred_region
        %s620 = ssub.s32 %s17, 2
        // Predicated region
        $region45: #{tpu_custom_call.1} parent=43 // pred_check
          %p621 = pneg %p93
        $region46: #{tpu_custom_call.1} parent=43 // pred_check_branch
          %623 = sbr.rel (%p621) target = $region48
        $region47: #{tpu_custom_call.1} parent=43 // pred_region
          %s624 = smul.u32 24, %s23
          %p625 = scmp.lt.s32.totalorder %s624, 71
          %s626 = scalar_select %p625, %s624, 71
          %s627 = smul.addr %s626, 8
          %s628 = scalar_lea.vmem %s2, %s627
        $region48: #{tpu_custom_call.1} parent=43 // pred_fallthru
          _
        // Predicated region
        $region49: #{tpu_custom_call.1} parent=43 // pred_check
          %p629 = pneg %p119
        $region50: #{tpu_custom_call.1} parent=43 // pred_check_branch
          %631 = sbr.rel (%p629) target = $region52
        $region51: #{tpu_custom_call.1} parent=43 // pred_region
          %s632 = sand.u32 %s104, 1
          %s633 = scalar_lea.sflag [#allocation3], %s632
          %s634 = sand.u32 %s104, 1
          %s635 = scalar_lea.vmem [#allocation2], %s634
          %637 = dma.done %s633, 16
        $region52: #{tpu_custom_call.1} parent=43 // pred_fallthru
          _
        // Predicated region
        $region53: #{tpu_custom_call.1} parent=43 // pred_check
          %p638 = pneg %p145
        $region54: #{tpu_custom_call.1} parent=43 // pred_check_branch
          %640 = sbr.rel (%p638) target = $region56
        $region55: #{tpu_custom_call.1} parent=43 // pred_region
          %s641 = sand.u32 %s130, 1
          %s642 = scalar_lea.sflag [#allocation5], %s641
          %s643 = sand.u32 %s130, 1
          %s644 = scalar_lea.vmem [#allocation4], %s643
          %646 = dma.done %s642, 16
        $region56: #{tpu_custom_call.1} parent=43 // pred_fallthru
          _
      $region44: #{tpu_custom_call.1} parent=5 // pred_fallthru
        _
    $region6: #{tpu_custom_call.1} parent=1 // loop_footer
      %s21 = sadd.s32 1, %s17
    $region7: #{tpu_custom_call.1} parent=1 // loop_footer_branch
      %16 = sbr.rel target = $region3
    $region8: #{tpu_custom_call.1} parent=1 // loop_exit
      _
    %647 = vsyncpa [#allocation3], 1
    %s648 = scalar_lea.sflag [#allocation3], 1
    %649 = vsyncpa %s648, 1
    %650 = vsyncpa [#allocation5], 1
    %s651 = scalar_lea.sflag [#allocation5], 1
    %652 = vsyncpa %s651, 1

</llo_original>
